<compile_context>
chip_gen: v6e
topology: v6e:2x2x1
jax: 0.10.0
libtpu: 0.0.40
codegen_flags: <defaults>
</compile_context>

<pallas_src>
import functools

import jax
import jax.numpy as jnp
from jax.experimental import pallas as pl
from jax.experimental.pallas import tpu as pltpu


def _round_up(x, m):
    return ((x + m - 1) // m) * m


def _patch_embed_kernel(x_ref, w_ref, b_ref, o_ref):
    # x_ref: (TM, K_pad)   flattened patch rows (bf16 or f32)
    # w_ref: (K_pad, TN)   conv weight reshaped & transposed
    # b_ref: (1, TN)       conv bias (f32)
    # o_ref: (TM, TN)
    acc = jnp.dot(x_ref[...], w_ref[...], preferred_element_type=jnp.float32)
    o_ref[...] = (acc + b_ref[...]).astype(o_ref.dtype)


def _vmem_budget_and_cap():
    """Generation-aware (tile budget, vmem_limit cap) in bytes.

    v5e/v6e have 128 MiB VMEM -> be generous so tiles stay at the ~512-row
    sweet spot for large K/E; v7x has 64 MiB per TensorCore -> conservative."""
    cap_bytes = 64 * 1024 * 1024
    try:
        info = pltpu.get_tpu_info()
        cap_bytes = int(getattr(info, "vmem_capacity_bytes", cap_bytes))
    except Exception:
        pass
    if cap_bytes >= 100 * 1024 * 1024:          # v5e / v6e (128 MiB VMEM)
        return 64 * 1024 * 1024, 96 * 1024 * 1024
    return 24 * 1024 * 1024, 48 * 1024 * 1024   # v7x (64 MiB per TC)


def _choose_tile_m(m_rows, k, tn, in_bytes, out_bytes, vmem_budget, row_align):
    """Pick an M tile that double-buffers within the VMEM budget."""
    resident = 2 * (k * tn * in_bytes + 8 * tn * 4)     # dbl-buffered W + bias
    per_row = 2 * (k * in_bytes + tn * out_bytes)       # dbl-buffered x + out row
    avail = max(vmem_budget - resident, 1 << 20)
    tm = int(avail // per_row)
    tm = max(min(tm, 1024), row_align)
    if tm >= m_rows:
        return m_rows                   # single block == full array dim (legal)
    if tm >= 128:
        tm = (tm // 128) * 128          # keep large tiles 128-row aligned
    else:
        tm = max((tm // row_align) * row_align, row_align)
    return tm


def patch_embedding_forward(x, conv_weight, conv_bias, patch_height, patch_width,
                            compute_dtype=jnp.bfloat16, out_dtype=None):
    """x: (B, C, H, W) NCHW.  conv_weight: (E, C, ph, pw).  conv_bias: (E,).

    Returns (B, num_patches, E) in `out_dtype` (default: x.dtype).
    compute_dtype=bf16 is a deliberate precision knob (f32 accumulation is
    always used); pass jnp.float32 for exact-parity math."""
    B, C, H, W = x.shape
    E = conv_weight.shape[0]
    ph, pw = patch_height, patch_width
    assert H % ph == 0 and W % pw == 0
    R, Cc = H // ph, W // pw
    N = R * Cc
    K = C * ph * pw
    M = B * N

    out_dtype = x.dtype if out_dtype is None else jnp.dtype(out_dtype)
    in_bytes = jnp.dtype(compute_dtype).itemsize
    out_bytes = jnp.dtype(out_dtype).itemsize
    row_align = 16 if in_bytes <= 2 else 8

    # ---- lane padding policy (gated; usually a no-op for production shapes) --
    K_pad = K if K % 128 == 0 else _round_up(K, 128)
    if E % 128 == 0 or E < 128:
        E_pad = E          # no pad: either already lane-dense or masked stores
    else:                  # beat 3-4x extra output traffic for tiny E
        E_pad = _round_up(E, 128)

    budget, limit_cap = _vmem_budget_and_cap()

    # ---- E tiling: stream W column blocks only when resident W is too big ---
    w_resident = 2 * K_pad * E_pad * in_bytes          # double-buffered weight
    if E_pad > 512 and E_pad % 128 == 0 and w_resident > min(16 << 20, budget // 3):
        tn = 512
    else:
        tn = E_pad

    tm = _choose_tile_m(M, K_pad, tn, in_bytes, out_bytes, budget, row_align)
    grid_n = pl.cdiv(E_pad, tn)
    # v7x: guarantee >= 2 grid steps so the "parallel" axes can be sharded
    # across its two TensorCores (harmless on single-core v5e/v6e).
    if tm >= M and grid_n == 1 and M >= 256:
        tm = _round_up(pl.cdiv(M, 2), 128)
    grid_m = pl.cdiv(M, tm)

    # ---- im2col glue: NO M padding, so it can fuse into the input DMA -------
    xp = x.reshape(B, C, R, ph, Cc, pw)
    xp = jnp.transpose(xp, (0, 2, 4, 1, 3, 5))          # (B, R, Cc, C, ph, pw)
    xp = xp.reshape(M, K).astype(compute_dtype)         # (M, K)
    if K_pad != K:
        xp = jnp.pad(xp, ((0, 0), (0, K_pad - K)))      # rare (K not mult. 128)

    w = conv_weight.reshape(E, K).T.astype(compute_dtype)   # (K, E)
    b = conv_bias.reshape(1, E).astype(jnp.float32)          # f32 bias add
    if K_pad != K:
        w = jnp.pad(w, ((0, K_pad - K), (0, 0)))
    if E_pad != E:
        w = jnp.pad(w, ((0, 0), (0, E_pad - E)))
        b = jnp.pad(b, ((0, 0), (0, E_pad - E)))

    # VMEM actually used (double-buffered x/out tiles + W/bias blocks).
    vmem_need = (2 * tm * (K_pad * in_bytes + tn * out_bytes)
                 + 2 * (K_pad * tn * in_bytes + 8 * tn * 4))
    vmem_limit = int(min(max(2 * vmem_need, 32 << 20, vmem_need + (4 << 20)),
                         limit_cap))

    cost = pl.CostEstimate(
        flops=2 * M * K_pad * E_pad,
        transcendentals=0,
        bytes_accessed=(M * K_pad * in_bytes          # activations
                        + K_pad * E_pad * in_bytes    # weight
                        + E_pad * 4                   # bias
                        + M * E_pad * out_bytes),     # output
    )

    # TODO(synk): once pipeline_mode support is verified on the deployed jax
    # version, add pl.Buffered(3) on the streamed patch input and Buffered(1)
    # on the resident weight/bias specs (v7x VMEM / DMA-latency tweak).
    out = pl.pallas_call(
        _patch_embed_kernel,
        out_shape=jax.ShapeDtypeStruct((M, E_pad), out_dtype),
        grid_spec=pltpu.PrefetchScalarGridSpec(
            num_scalar_prefetch=0,
            grid=(grid_m, grid_n),
            in_specs=[
                pl.BlockSpec((tm, K_pad), lambda i, j: (i, 0)),   # patch rows
                pl.BlockSpec((K_pad, tn), lambda i, j: (0, j)),   # weight
                pl.BlockSpec((1, tn), lambda i, j: (0, j)),       # bias
            ],
            out_specs=pl.BlockSpec((tm, tn), lambda i, j: (i, j)),
        ),
        compiler_params=pltpu.CompilerParams(
            # Both grid axes are independent -> shard across v7x's two cores.
            dimension_semantics=("parallel", "parallel"),
            vmem_limit_bytes=vmem_limit,
            # Fuse the patch-extraction transpose/reshape/cast into input DMA.
            allow_input_fusion=[True, False, False],
        ),
        cost_estimate=cost,
    )(xp, w, b)

    return out[:, :E].reshape(B, N, E)


if __name__ == "__main__":
    # Small shapes consistent with the module.
    batch = 2
    in_channels = 4
    H = W = 16
    patch_height = patch_width = 8
    dim_embedding = 32

    key = jax.random.PRNGKey(0)
    kx, kw, kb, kc = jax.random.split(key, 4)

    x = jax.random.normal(kx, (batch, in_channels, H, W), dtype=jnp.float32)
    conv_weight = jax.random.normal(
        kw, (dim_embedding, in_channels, patch_height, patch_width),
        dtype=jnp.float32) * 0.02
    conv_bias = jax.random.normal(kb, (dim_embedding,), dtype=jnp.float32) * 0.02
    # Parameter present in the PyTorch module but unused in its forward().
    cls_token = jax.random.normal(kc, (1, 1, dim_embedding), dtype=jnp.float32)

    fwd = jax.jit(functools.partial(patch_embedding_forward,
                                    patch_height=patch_height,
                                    patch_width=patch_width))
    y = fwd(x, conv_weight, conv_bias)
    jax.block_until_ready(y)

    # Reference of the same math (same bf16 input rounding, f32 accumulation).
    B, C, _, _ = x.shape
    R, Cc = H // patch_height, W // patch_width
    xp_ref = x.reshape(B, C, R, patch_height, Cc, patch_width)
    xp_ref = jnp.transpose(xp_ref, (0, 2, 4, 1, 3, 5)).reshape(B * R * Cc, -1)
    ref = jnp.dot(xp_ref.astype(jnp.bfloat16),
                  conv_weight.reshape(dim_embedding, -1).T.astype(jnp.bfloat16),
                  preferred_element_type=jnp.float32) + conv_bias
    ref = ref.reshape(B, R * Cc, dim_embedding)

    assert y.shape == (batch, R * Cc, dim_embedding)
    assert jnp.allclose(y, ref, atol=1e-3, rtol=1e-3), \
        float(jnp.max(jnp.abs(y - ref)))

    print("KERNEL_OK")
</pallas_src>

<mosaic_0001>
module attributes {stable_mosaic.version = 11 : i64} {
  func.func @_patch_embed_kernel(%arg0: i32, %arg1: i32, %arg2: memref<8x256xbf16, #tpu.memory_space<vmem>>, %arg3: memref<256x32xbf16, #tpu.memory_space<vmem>>, %arg4: memref<1x32xf32, #tpu.memory_space<vmem>>, %arg5: memref<8x32xf32, #tpu.memory_space<vmem>>) attributes {dimension_semantics = [#tpu.dimension_semantics<parallel>, #tpu.dimension_semantics<parallel>], iteration_bounds = array<i64: 1, 1>, scalar_prefetch = 0 : i64, scratch_operands = 0 : i64, tpu.core_type = #tpu.core_type<tc>, window_params = [{transform_indices = @transform_0, window_bounds = array<i64: 8, 256>}, {transform_indices = @transform_1, window_bounds = array<i64: 256, 32>}, {transform_indices = @transform_2, window_bounds = array<i64: 1, 32>}, {transform_indices = @transform_3, window_bounds = array<i64: 8, 32>}]} {
    %c0 = arith.constant 0 : index
    %c0_0 = arith.constant 0 : index
    %0 = vector.load %arg2[%c0, %c0_0] : memref<8x256xbf16, #tpu.memory_space<vmem>>, vector<8x256xbf16>
    %c0_1 = arith.constant 0 : index
    %c0_2 = arith.constant 0 : index
    %1 = vector.load %arg3[%c0_1, %c0_2] : memref<256x32xbf16, #tpu.memory_space<vmem>>, vector<256x32xbf16>
    %cst = arith.constant dense<0.000000e+00> : vector<8x32xf32>
    %2 = tpu.matmul %0, %1, %cst {dimension_numbers = #tpu.dot_dimension_numbers<[1], [0], [0], [1], [0, 0, 1, 1], [], []>} : vector<8x256xbf16>, vector<256x32xbf16>, vector<8x32xf32> -> vector<8x32xf32>
    %c0_3 = arith.constant 0 : index
    %c0_4 = arith.constant 0 : index
    %3 = vector.load %arg4[%c0_3, %c0_4] : memref<1x32xf32, #tpu.memory_space<vmem>>, vector<1x32xf32>
    %4 = vector.broadcast %3 : vector<1x32xf32> to vector<8x32xf32>
    %5 = arith.addf %2, %4 : vector<8x32xf32>
    %c0_5 = arith.constant 0 : index
    %c0_6 = arith.constant 0 : index
    %6 = vector.load %arg5[%c0_5, %c0_6] : memref<8x32xf32, #tpu.memory_space<vmem>>, vector<8x32xf32>
    tpu.vector_store %arg5[%c0_5, %c0_6], %5 {strides = array<i32>} : memref<8x32xf32, #tpu.memory_space<vmem>>, vector<8x32xf32>,
    return
  }
  func.func @transform_0(%arg0: i32, %arg1: i32) -> (i32, i32) {
    %c0_i32 = arith.constant 0 : i32
    %c0_i32_0 = arith.constant 0 : i32
    return %arg0, %c0_i32 : i32, i32
  }
  func.func @transform_1(%arg0: i32, %arg1: i32) -> (i32, i32) {
    %c0_i32 = arith.constant 0 : i32
    %c0_i32_0 = arith.constant 0 : i32
    return %c0_i32, %arg1 : i32, i32
  }
  func.func @transform_2(%arg0: i32, %arg1: i32) -> (i32, i32) {
    %c0_i32 = arith.constant 0 : i32
    %c0_i32_0 = arith.constant 0 : i32
    return %c0_i32, %arg1 : i32, i32
  }
  func.func @transform_3(%arg0: i32, %arg1: i32) -> (i32, i32) {
    %c0_i32 = arith.constant 0 : i32
    return %arg0, %arg1 : i32, i32
  }
}

</mosaic_0001>

<llo_original>
// kernel: patch_embedding_forward.1
$region0: #{patch_embedding_forward.1}
  #allocation0 [shape = 'u32[]', space=smem, size = 0x4, offset = 0x4, fixed_abs, tag = 'smem constant byte address 0x4 - core index']
  #allocation1 [shape = 'u32[144,128]{1,0:T(1,128)}', space=vmem, size = 0x12000, scoped, tag = 'internal scratch']
  %s0 = inlined_call_operand.vmem [shape: bf16[8,256], index: 0, kind: input, shape index: {}]
  %s1 = inlined_call_operand.vmem [shape: bf16[256,32], index: 1, kind: input, shape index: {}]
  %s2 = inlined_call_operand.vmem [shape: f32[1,32], index: 2, kind: input, shape index: {}]
  %s3 = inlined_call_operand.hbm [shape: f32[8,32], index: 3, kind: output, shape index: {}]
  %s4 = sld [smem:[#allocation0]]
  $region22: #{patch_embedding_forward.1} parent=0
    _
  %s6 = ssub.s32 1, %s4
  %s7 = scalar_select 0, %s6, %s4
  $region1: #{patch_embedding_forward.1} parent=0
    #allocation2 [shape = 'u8[4096]{0}', space=vmem, size = 0x1000, scoped, tag = 'output window, operand 0, single buffered']
    #allocation3 [shape = 's32[1]{0}', space=sflag, size = 0x4, scoped, tag = 'scoped memory for patch_embedding_forward.1']
    %8 = vsyncpa [#allocation3], 0
    // Predicated region
    $region2: #{patch_embedding_forward.1} parent=1 // pred_check
      _
    $region3: #{patch_embedding_forward.1} parent=1 // pred_check_branch
      %10 = sbr.rel (0) target = $region5
    $region4: #{patch_embedding_forward.1} parent=1 // pred_region
      _
    $region5: #{patch_embedding_forward.1} parent=1 // pred_fallthru
      _
    // Predicated region
    $region6: #{patch_embedding_forward.1} parent=1 // pred_check
      _
    $region7: #{patch_embedding_forward.1} parent=1 // pred_check_branch
      %12 = sbr.rel (0) target = $region9
    $region8: #{patch_embedding_forward.1} parent=1 // pred_region
      _
    $region9: #{patch_embedding_forward.1} parent=1 // pred_fallthru
      _
    // Predicated region
    $region10: #{patch_embedding_forward.1} parent=1 // pred_check
      _
    $region11: #{patch_embedding_forward.1} parent=1 // pred_check_branch
      %14 = sbr.rel (0) target = $region13
    $region12: #{patch_embedding_forward.1} parent=1 // pred_region
      _
    $region13: #{patch_embedding_forward.1} parent=1 // pred_fallthru
      _
    %v16 = vld [vmem:[%s0] sm:$0xff]
    %v17 = vld [vmem:[%s1] sm:$0xf]
    %v18 = vld [vmem:[%s1 + $0x4] sm:$0xf]
    %v19 = vld [vmem:[%s1 + $0x8] sm:$0xf]
    %v20 = vld [vmem:[%s1 + $0xc] sm:$0xf]
    %v21 = vld [vmem:[%s1 + $0x10] sm:$0xf]
    %v22 = vld [vmem:[%s1 + $0x14] sm:$0xf]
    %v23 = vld [vmem:[%s1 + $0x18] sm:$0xf]
    %v24 = vld [vmem:[%s1 + $0x1c] sm:$0xf]
    %v25 = vld [vmem:[%s1 + $0x20] sm:$0xf]
    %v26 = vld [vmem:[%s1 + $0x24] sm:$0xf]
    %v27 = vld [vmem:[%s1 + $0x28] sm:$0xf]
    %v28 = vld [vmem:[%s1 + $0x2c] sm:$0xf]
    %v29 = vld [vmem:[%s1 + $0x30] sm:$0xf]
    %v30 = vld [vmem:[%s1 + $0x34] sm:$0xf]
    %v31 = vld [vmem:[%s1 + $0x38] sm:$0xf]
    %v32 = vld [vmem:[%s1 + $0x3c] sm:$0xf]
    %v33 = vld [vmem:[%s1 + $0x40] sm:$0xf]
    %v34 = vld [vmem:[%s1 + $0x44] sm:$0xf]
    %v35 = vld [vmem:[%s1 + $0x48] sm:$0xf]
    %v36 = vld [vmem:[%s1 + $0x4c] sm:$0xf]
    %v37 = vld [vmem:[%s1 + $0x50] sm:$0xf]
    %v38 = vld [vmem:[%s1 + $0x54] sm:$0xf]
    %v39 = vld [vmem:[%s1 + $0x58] sm:$0xf]
    %v40 = vld [vmem:[%s1 + $0x5c] sm:$0xf]
    %v41 = vld [vmem:[%s1 + $0x60] sm:$0xf]
    %v42 = vld [vmem:[%s1 + $0x64] sm:$0xf]
    %v43 = vld [vmem:[%s1 + $0x68] sm:$0xf]
    %v44 = vld [vmem:[%s1 + $0x6c] sm:$0xf]
    %v45 = vld [vmem:[%s1 + $0x70] sm:$0xf]
    %v46 = vld [vmem:[%s1 + $0x74] sm:$0xf]
    %v47 = vld [vmem:[%s1 + $0x78] sm:$0xf]
    %v48 = vld [vmem:[%s1 + $0x7c] sm:$0xf]
    %v49 = vld [vmem:[%s2] sm:$0x1]
    %v51 = vlaneseq
    %v52 = vshrl.u32 %v51, 7
    %v53 = vsub.s32 0, %v52
    %v54 = vrot.slane %v49, %v53
    %v57 = vunpack.c.l.b16 %v16
    %v58 = vunpack.c.h.b16 %v16
    %v59 = vpack.c.b16 %v57, %v57
    %v60 = vpack.c.b16 %v58, %v58
    %v95 = vunpack.c.l.b16 %v17
    %v96 = vunpack.c.l.b16 %v18
    %v97 = vunpack.c.l.b16 %v19
    %v98 = vunpack.c.l.b16 %v20
    %v99 = vunpack.c.l.b16 %v21
    %v100 = vunpack.c.l.b16 %v22
    %v101 = vunpack.c.l.b16 %v23
    %v102 = vunpack.c.l.b16 %v24
    %v103 = vunpack.c.l.b16 %v25
    %v104 = vunpack.c.l.b16 %v26
    %v105 = vunpack.c.l.b16 %v27
    %v106 = vunpack.c.l.b16 %v28
    %v107 = vunpack.c.l.b16 %v29
    %v108 = vunpack.c.l.b16 %v30
    %v109 = vunpack.c.l.b16 %v31
    %v110 = vunpack.c.l.b16 %v32
    %v111 = vunpack.c.l.b16 %v33
    %v112 = vunpack.c.l.b16 %v34
    %v113 = vunpack.c.l.b16 %v35
    %v114 = vunpack.c.l.b16 %v36
    %v115 = vunpack.c.l.b16 %v37
    %v116 = vunpack.c.l.b16 %v38
    %v117 = vunpack.c.l.b16 %v39
    %v118 = vunpack.c.l.b16 %v40
    %v119 = vunpack.c.l.b16 %v41
    %v120 = vunpack.c.l.b16 %v42
    %v121 = vunpack.c.l.b16 %v43
    %v122 = vunpack.c.l.b16 %v44
    %v123 = vunpack.c.l.b16 %v45
    %v124 = vunpack.c.l.b16 %v46
    %v125 = vunpack.c.l.b16 %v47
    %v126 = vunpack.c.l.b16 %v48
    %v127 = vpack.c.b16 %v96, %v95
    %v128 = vpack.c.b16 %v98, %v97
    %v129 = vpack.c.b16 %v100, %v99
    %v130 = vpack.c.b16 %v102, %v101
    %v131 = vpack.c.b16 %v104, %v103
    %v132 = vpack.c.b16 %v106, %v105
    %v133 = vpack.c.b16 %v108, %v107
    %v134 = vpack.c.b16 %v110, %v109
    %v135 = vpack.c.b16 %v112, %v111
    %v136 = vpack.c.b16 %v114, %v113
    %v137 = vpack.c.b16 %v116, %v115
    %v138 = vpack.c.b16 %v118, %v117
    %v139 = vpack.c.b16 %v120, %v119
    %v140 = vpack.c.b16 %v122, %v121
    %v141 = vpack.c.b16 %v124, %v123
    %v142 = vpack.c.b16 %v126, %v125
    %159 = vmatprep.subr.bf16.mxu0 0
    %160 = vmatpush1.bf16.msra.mxu0 %v134
    %161 = vmatprep.subr.bf16.mxu0 0
    %162 = vmatpush1.bf16.msra.mxu0 %v133
    %163 = vmatprep.subr.bf16.mxu0 0
    %164 = vmatpush1.bf16.msra.mxu0 %v132
    %165 = vmatprep.subr.bf16.mxu0 0
    %166 = vmatpush1.bf16.msra.mxu0 %v131
    %167 = vmatprep.subr.bf16.mxu0 0
    %168 = vmatpush1.bf16.msra.mxu0 %v130
    %169 = vmatprep.subr.bf16.mxu0 0
    %170 = vmatpush1.bf16.msra.mxu0 %v129
    %171 = vmatprep.subr.bf16.mxu0 0
    %172 = vmatpush1.bf16.msra.mxu0 %v128
    %173 = vmatprep.subr.bf16.mxu0 0
    %174 = vmatpush1.bf16.msra.mxu0 %v127
    %175 = vmatprep.subr.bf16.mxu0 0
    %176 = vmatpush2.bf16.msra.mxu0 %v142
    %177 = vmatprep.subr.bf16.mxu0 0
    %178 = vmatpush2.bf16.msra.mxu0 %v141
    %179 = vmatprep.subr.bf16.mxu0 0
    %180 = vmatpush2.bf16.msra.mxu0 %v140
    %181 = vmatprep.subr.bf16.mxu0 0
    %182 = vmatpush2.bf16.msra.mxu0 %v139
    %183 = vmatprep.subr.bf16.mxu0 0
    %184 = vmatpush2.bf16.msra.mxu0 %v138
    %185 = vmatprep.subr.bf16.mxu0 0
    %186 = vmatpush2.bf16.msra.mxu0 %v137
    %187 = vmatprep.subr.bf16.mxu0 0
    %188 = vmatpush2.bf16.msra.mxu0 %v136
    %189 = vmatprep.subr.bf16.mxu0 0
    %190 = vmatpush2.bf16.msra.mxu0 %v135
    %191 = vmatprep.mubr.bf16.mxu0 %v60
    %192 = vmatmul.mubr.bf16.gmra.mxu0 %v59
    %v193 = vpop.f32.mrf.mxu0
    %v194 = vadd.f32 %v54, %v193
    %v195 = vpop.f32.mrf.mxu0
    %v196 = vpop.f32.mrf.mxu0
    %v197 = vpop.f32.mrf.mxu0
    %198 = vdwg.mxu0
    %vm199 = vcmask 261120
    %200 = vst.msk [vmem:[#allocation2] sm:$0xff] %vm199, %v194
    // Predicated region
    $region14: #{patch_embedding_forward.1} parent=1 // pred_check
      _
    $region15: #{patch_embedding_forward.1} parent=1 // pred_check_branch
      %202 = sbr.rel (0) target = $region17
    $region16: #{patch_embedding_forward.1} parent=1 // pred_region
      %s204 = ssub.s32 128, 128
      %205 = vsyncadd [#allocation3], %s204
      %s207 = sshll.u32 [#allocation2], 4
      %s208 = int_to_ptr.vmem [resolvable:$true] %s207
      %210 = dma.vmem_to_hbm [thread:$0]  %s208, 128, %s3, [#allocation3]
    $region17: #{patch_embedding_forward.1} parent=1 // pred_fallthru
      _
    // Predicated region
    $region18: #{patch_embedding_forward.1} parent=1 // pred_check
      _
    $region19: #{patch_embedding_forward.1} parent=1 // pred_check_branch
      %212 = sbr.rel (0) target = $region21
    $region20: #{patch_embedding_forward.1} parent=1 // pred_region
      %213 = dma.done [#allocation3], 128
    $region21: #{patch_embedding_forward.1} parent=1 // pred_fallthru
      _
    %214 = vsyncpa [#allocation3], 1

</llo_original>
